<compile_context>
chip_gen: v6e
topology: v6e:2x2x1
jax: 0.10.0
libtpu: 0.0.40
codegen_flags: <defaults>
</compile_context>

<pallas_src>
import jax
import jax.numpy as jnp
from jax.experimental import pallas as pl
from jax.experimental.pallas import tpu as pltpu

OBS_DIM = 4
HIDDEN = 96
NUM_ACTIONS = 2
PAD_H = 128       # hidden dim padded to a full sublane tile (96 -> 128)
MAX_TILE = 2048   # cap on batch tile (lanes)


def policy_kernel(xT_ref, w1T_ref, b1_ref, wd_ref, bd_ref, o_ref):
    # xT_ref : (4, tb)      w1T_ref : (128, 4)   b1_ref : (128, 1)
    # wd_ref : (128, 1)     bd_ref  : (1, 1)     o_ref  : (2, tb)
    xT = xT_ref[...]

    # ---- affine1 + ReLU: unrolled VPU broadcast-FMA over K=4 ----------------
    # h[j, b] = b1[j] + sum_k w1[k, j] * x[b, k]   (hidden on sublanes, batch on lanes)
    h = b1_ref[...]                                   # (128, 1) -> broadcasts
    h = h + w1T_ref[:, 0:1] * xT[0:1, :]
    h = h + w1T_ref[:, 1:2] * xT[1:2, :]
    h = h + w1T_ref[:, 2:3] * xT[2:3, :]
    h = h + w1T_ref[:, 3:4] * xT[3:4, :]
    h = jnp.maximum(h, 0.0)                           # (128, tb); padded rows == 0

    # Dropout(p=0.5): eval-mode identity (deterministic forward).
    # TODO(synk): training-mode dropout would use pltpu.prng_seed +
    #             pltpu.prng_random_bits for a Bernoulli(0.5) mask * 2.0 scale;
    #             torch RNG cannot be matched bit-exactly anyway.

    # ---- 2-action softmax as a sigmoid of the logit difference --------------
    # d = s1 - s0; padded hidden rows contribute nothing (wd rows are zero).
    d = jnp.sum(h * wd_ref[...], axis=0, keepdims=True) + bd_ref[...]   # (1, tb)
    p1 = 1.0 / (1.0 + jnp.exp(-d))                    # exact divide; EUP exp
    o_ref[0:1, :] = 1.0 - p1
    o_ref[1:2, :] = p1


def prepare_params(w1, b1, w2, b2):
    """One-time repack of (4,96)/(96,)/(96,2)/(2,) params into kernel layout.

    Hoisted out of policy_forward so padding is not re-done every call.
    """
    w1 = jnp.asarray(w1, jnp.float32)
    b1 = jnp.asarray(b1, jnp.float32)
    w2 = jnp.asarray(w2, jnp.float32)
    b2 = jnp.asarray(b2, jnp.float32)
    w1T = jnp.zeros((PAD_H, OBS_DIM), jnp.float32).at[:HIDDEN, :].set(w1.T)
    b1c = jnp.zeros((PAD_H, 1), jnp.float32).at[:HIDDEN, 0].set(b1)
    wd = jnp.zeros((PAD_H, 1), jnp.float32).at[:HIDDEN, 0].set(w2[:, 1] - w2[:, 0])
    bd = jnp.reshape(b2[1] - b2[0], (1, 1))
    return w1T, b1c, wd, bd


def _round_up(n, m):
    return ((n + m - 1) // m) * m


def _choose_tile(B):
    """Pick (padded_batch, batch_tile). Batch is the lane axis -> pad to 128."""
    Bp = _round_up(B, 128)
    if Bp <= 256:
        return Bp, Bp                                  # single small block
    tb = min(MAX_TILE, _round_up(Bp // 2, 128))        # >=2 blocks for megacore
    Bp = _round_up(Bp, tb)
    return Bp, tb


def policy_forward(x, params):
    """x: (B, 4) float32 -> action probabilities (B, 2) float32."""
    w1T, b1c, wd, bd = params
    B = x.shape[0]
    Bp, tb = _choose_tile(B)

    xT = jnp.zeros((OBS_DIM, Bp), jnp.float32).at[:, :B].set(x.T)

    probsT = pl.pallas_call(
        policy_kernel,
        out_shape=jax.ShapeDtypeStruct((NUM_ACTIONS, Bp), jnp.float32),
        grid_spec=pltpu.PrefetchScalarGridSpec(
            num_scalar_prefetch=0,
            grid=(Bp // tb,),
            in_specs=[
                pl.BlockSpec((OBS_DIM, tb), lambda i: (0, i)),
                pl.BlockSpec((PAD_H, OBS_DIM), lambda i: (0, 0)),
                pl.BlockSpec((PAD_H, 1), lambda i: (0, 0)),
                pl.BlockSpec((PAD_H, 1), lambda i: (0, 0)),
                pl.BlockSpec((1, 1), lambda i: (0, 0)),
            ],
            out_specs=pl.BlockSpec((NUM_ACTIONS, tb), lambda i: (0, i)),
        ),
        compiler_params=pltpu.CompilerParams(
            dimension_semantics=("parallel",)),        # shard batch across TCs
    )(xT, w1T, b1c, wd, bd)

    return probsT[:, :B].T                             # (B, 2)


def init_params(key):
    """nn.Linear-style init: U(-1/sqrt(fan_in), +). Weights stored as (in, out)."""
    k1, k2, k3, k4 = jax.random.split(key, 4)
    bound1 = 1.0 / jnp.sqrt(float(OBS_DIM))
    bound2 = 1.0 / jnp.sqrt(float(HIDDEN))
    w1 = jax.random.uniform(k1, (OBS_DIM, HIDDEN), jnp.float32, -bound1, bound1)
    b1 = jax.random.uniform(k2, (HIDDEN,), jnp.float32, -bound1, bound1)
    w2 = jax.random.uniform(k3, (HIDDEN, NUM_ACTIONS), jnp.float32, -bound2, bound2)
    b2 = jax.random.uniform(k4, (NUM_ACTIONS,), jnp.float32, -bound2, bound2)
    return w1, b1, w2, b2


if __name__ == "__main__":
    key = jax.random.PRNGKey(0)
    kx, kp = jax.random.split(key)

    w1, b1, w2, b2 = init_params(kp)
    params = prepare_params(w1, b1, w2, b2)

    def ref_forward(x):
        h = jnp.maximum(x @ w1 + b1, 0.0)              # eval-mode dropout == identity
        s = h @ w2 + b2
        return jax.nn.softmax(s, axis=-1)

    # small CartPole-style batch (8, 4) plus a multi-block batch to exercise the grid
    for bsz in (8, 300):
        x = jax.random.normal(jax.random.fold_in(kx, bsz), (bsz, OBS_DIM), jnp.float32)
        probs = jax.block_until_ready(policy_forward(x, params))
        ref = ref_forward(x)
        assert probs.shape == (bsz, NUM_ACTIONS)
        assert jnp.allclose(probs, ref, atol=1e-5, rtol=1e-5)
        assert jnp.allclose(jnp.sum(probs, axis=-1), 1.0, atol=1e-5)

    print("KERNEL_OK")
</pallas_src>

<mosaic_0001>
module attributes {stable_mosaic.version = 11 : i64} {
  func.func @policy_kernel(%arg0: i32, %arg1: memref<4x128xf32, #tpu.memory_space<vmem>>, %arg2: memref<128x4xf32, #tpu.memory_space<vmem>>, %arg3: memref<128x1xf32, #tpu.memory_space<vmem>>, %arg4: memref<128x1xf32, #tpu.memory_space<vmem>>, %arg5: memref<1x1xf32, #tpu.memory_space<vmem>>, %arg6: memref<2x128xf32, #tpu.memory_space<vmem>>) attributes {dimension_semantics = [#tpu.dimension_semantics<parallel>], iteration_bounds = array<i64: 1>, scalar_prefetch = 0 : i64, scratch_operands = 0 : i64, tpu.core_type = #tpu.core_type<tc>, window_params = [{transform_indices = @transform_0, window_bounds = array<i64: 4, 128>}, {pipeline_mode = #tpu.pipeline_mode<synchronous>, transform_indices = @transform_1, window_bounds = array<i64: 128, 4>}, {pipeline_mode = #tpu.pipeline_mode<synchronous>, transform_indices = @transform_2, window_bounds = array<i64: 128, 1>}, {pipeline_mode = #tpu.pipeline_mode<synchronous>, transform_indices = @transform_3, window_bounds = array<i64: 128, 1>}, {pipeline_mode = #tpu.pipeline_mode<synchronous>, transform_indices = @transform_4, window_bounds = array<i64: 1, 1>}, {transform_indices = @transform_5, window_bounds = array<i64: 2, 128>}]} {
    %c0 = arith.constant 0 : index
    %c0_0 = arith.constant 0 : index
    %0 = vector.load %arg1[%c0, %c0_0] : memref<4x128xf32, #tpu.memory_space<vmem>>, vector<4x128xf32>
    %c0_1 = arith.constant 0 : index
    %c0_2 = arith.constant 0 : index
    %1 = vector.load %arg3[%c0_1, %c0_2] : memref<128x1xf32, #tpu.memory_space<vmem>>, vector<128x1xf32>
    %c0_3 = arith.constant 0 : index
    %c0_4 = arith.constant 0 : index
    %2 = vector.load %arg2[%c0_3, %c0_4] : memref<128x4xf32, #tpu.memory_space<vmem>>, vector<128x1xf32>
    %3 = vector.extract_strided_slice %0 {offsets = [0, 0], sizes = [1, 128], strides = [1, 1]} : vector<4x128xf32> to vector<1x128xf32>
    %4 = vector.broadcast %2 : vector<128x1xf32> to vector<128x128xf32>
    %5 = vector.broadcast %3 : vector<1x128xf32> to vector<128x128xf32>
    %6 = arith.mulf %4, %5 : vector<128x128xf32>
    %7 = vector.broadcast %1 : vector<128x1xf32> to vector<128x128xf32>
    %8 = arith.addf %7, %6 : vector<128x128xf32>
    %c0_5 = arith.constant 0 : index
    %c1 = arith.constant 1 : index
    %9 = vector.load %arg2[%c0_5, %c1] : memref<128x4xf32, #tpu.memory_space<vmem>>, vector<128x1xf32>
    %10 = vector.extract_strided_slice %0 {offsets = [1, 0], sizes = [1, 128], strides = [1, 1]} : vector<4x128xf32> to vector<1x128xf32>
    %11 = vector.broadcast %9 : vector<128x1xf32> to vector<128x128xf32>
    %12 = vector.broadcast %10 : vector<1x128xf32> to vector<128x128xf32>
    %13 = arith.mulf %11, %12 : vector<128x128xf32>
    %14 = arith.addf %8, %13 : vector<128x128xf32>
    %c0_6 = arith.constant 0 : index
    %c2 = arith.constant 2 : index
    %15 = vector.load %arg2[%c0_6, %c2] : memref<128x4xf32, #tpu.memory_space<vmem>>, vector<128x1xf32>
    %16 = vector.extract_strided_slice %0 {offsets = [2, 0], sizes = [1, 128], strides = [1, 1]} : vector<4x128xf32> to vector<1x128xf32>
    %17 = vector.broadcast %15 : vector<128x1xf32> to vector<128x128xf32>
    %18 = vector.broadcast %16 : vector<1x128xf32> to vector<128x128xf32>
    %19 = arith.mulf %17, %18 : vector<128x128xf32>
    %20 = arith.addf %14, %19 : vector<128x128xf32>
    %c0_7 = arith.constant 0 : index
    %c3 = arith.constant 3 : index
    %21 = vector.load %arg2[%c0_7, %c3] : memref<128x4xf32, #tpu.memory_space<vmem>>, vector<128x1xf32>
    %22 = vector.extract_strided_slice %0 {offsets = [3, 0], sizes = [1, 128], strides = [1, 1]} : vector<4x128xf32> to vector<1x128xf32>
    %23 = vector.broadcast %21 : vector<128x1xf32> to vector<128x128xf32>
    %24 = vector.broadcast %22 : vector<1x128xf32> to vector<128x128xf32>
    %25 = arith.mulf %23, %24 : vector<128x128xf32>
    %26 = arith.addf %20, %25 : vector<128x128xf32>
    %cst = arith.constant 0.000000e+00 : f32
    %27 = vector.broadcast %cst : f32 to vector<128x128xf32>
    %28 = arith.maximumf %26, %27 : vector<128x128xf32>
    %c0_8 = arith.constant 0 : index
    %c0_9 = arith.constant 0 : index
    %29 = vector.load %arg4[%c0_8, %c0_9] : memref<128x1xf32, #tpu.memory_space<vmem>>, vector<128x1xf32>
    %30 = vector.broadcast %29 : vector<128x1xf32> to vector<128x128xf32>
    %31 = arith.mulf %28, %30 : vector<128x128xf32>
    %cst_10 = arith.constant dense<0.000000e+00> : vector<128xf32>
    %32 = vector.multi_reduction <add>, %31, %cst_10 [0] : vector<128x128xf32> to vector<128xf32>
    %33 = vector.shape_cast %32 : vector<128xf32> to vector<1x128xf32>
    %c0_11 = arith.constant 0 : index
    %c0_12 = arith.constant 0 : index
    %34 = vector.load %arg5[%c0_11, %c0_12] : memref<1x1xf32, #tpu.memory_space<vmem>>, vector<1x1xf32>
    %35 = vector.broadcast %34 : vector<1x1xf32> to vector<1x128xf32>
    %36 = arith.addf %33, %35 : vector<1x128xf32>
    %cst_13 = arith.constant 0.000000e+00 : f32
    %37 = vector.broadcast %cst_13 : f32 to vector<1x128xf32>
    %38 = arith.subf %37, %36 : vector<1x128xf32>
    %39 = math.exp %38 : vector<1x128xf32>
    %cst_14 = arith.constant 1.000000e+00 : f32
    %40 = vector.broadcast %cst_14 : f32 to vector<1x128xf32>
    %41 = arith.addf %40, %39 : vector<1x128xf32>
    %cst_15 = arith.constant 1.000000e+00 : f32
    %42 = vector.broadcast %cst_15 : f32 to vector<1x128xf32>
    %43 = arith.divf %42, %41 : vector<1x128xf32>
    %cst_16 = arith.constant 1.000000e+00 : f32
    %44 = vector.broadcast %cst_16 : f32 to vector<1x128xf32>
    %45 = arith.subf %44, %43 : vector<1x128xf32>
    %c0_17 = arith.constant 0 : index
    %c0_18 = arith.constant 0 : index
    %46 = vector.load %arg6[%c0_17, %c0_18] : memref<2x128xf32, #tpu.memory_space<vmem>>, vector<1x128xf32>
    tpu.vector_store %arg6[%c0_17, %c0_18], %45 {strides = array<i32>} : memref<2x128xf32, #tpu.memory_space<vmem>>, vector<1x128xf32>,
    %c1_19 = arith.constant 1 : index
    %c0_20 = arith.constant 0 : index
    %47 = vector.load %arg6[%c1_19, %c0_20] : memref<2x128xf32, #tpu.memory_space<vmem>>, vector<1x128xf32>
    tpu.vector_store %arg6[%c1_19, %c0_20], %43 {strides = array<i32>} : memref<2x128xf32, #tpu.memory_space<vmem>>, vector<1x128xf32>,
    return
  }
  func.func @transform_0(%arg0: i32) -> (i32, i32) {
    %c0_i32 = arith.constant 0 : i32
    %c0_i32_0 = arith.constant 0 : i32
    return %c0_i32, %arg0 : i32, i32
  }
  func.func @transform_1(%arg0: i32) -> (i32, i32) {
    %c0_i32 = arith.constant 0 : i32
    %c0_i32_0 = arith.constant 0 : i32
    %c0_i32_1 = arith.constant 0 : i32
    return %c0_i32, %c0_i32_0 : i32, i32
  }
  func.func @transform_2(%arg0: i32) -> (i32, i32) {
    %c0_i32 = arith.constant 0 : i32
    %c0_i32_0 = arith.constant 0 : i32
    %c0_i32_1 = arith.constant 0 : i32
    return %c0_i32, %c0_i32_0 : i32, i32
  }
  func.func @transform_3(%arg0: i32) -> (i32, i32) {
    %c0_i32 = arith.constant 0 : i32
    %c0_i32_0 = arith.constant 0 : i32
    %c0_i32_1 = arith.constant 0 : i32
    return %c0_i32, %c0_i32_0 : i32, i32
  }
  func.func @transform_4(%arg0: i32) -> (i32, i32) {
    %c0_i32 = arith.constant 0 : i32
    %c0_i32_0 = arith.constant 0 : i32
    %c0_i32_1 = arith.constant 0 : i32
    return %c0_i32, %c0_i32_0 : i32, i32
  }
  func.func @transform_5(%arg0: i32) -> (i32, i32) {
    %c0_i32 = arith.constant 0 : i32
    %c0_i32_0 = arith.constant 0 : i32
    return %c0_i32, %arg0 : i32, i32
  }
}

</mosaic_0001>

<llo_original>
// kernel: tpu_custom_call.1
$region0: #{tpu_custom_call.1}
  #allocation0 [shape = 'u32[]', space=smem, size = 0x4, offset = 0x4, fixed_abs, tag = 'smem constant byte address 0x4 - core index']
  #allocation1 [shape = 'u32[144,128]{1,0:T(1,128)}', space=vmem, size = 0x12000, scoped, tag = 'internal scratch']
  #allocation2 [shape = 'f32[1,1]{1,0:T(1,128)S(1)}', space=vmem, size = 0x200, scoped, tag = 'scoped memory for tpu_custom_call.1']
  %s0 = inlined_call_operand.vmem [shape: f32[4,128], index: 0, kind: input, shape index: {}]
  %s1 = inlined_call_operand.vmem [shape: f32[128,4], index: 1, kind: input, shape index: {}]
  %s2 = inlined_call_operand.vmem [shape: f32[128,1], index: 2, kind: input, shape index: {}]
  %s3 = inlined_call_operand.vmem [shape: f32[128,1], index: 3, kind: input, shape index: {}]
  %s4 = inlined_call_operand.<no memory space> [shape: f32[1,1], index: 4, kind: input, shape index: {}]
  %s5 = inlined_call_operand.hbm [shape: f32[2,128], index: 5, kind: output, shape index: {}]
  %s6 = sld [smem:[#allocation0]]
  $region30: #{tpu_custom_call.1} parent=0
    _
  %s8 = ssub.s32 1, %s6
  %s9 = scalar_select 0, %s8, %s6
  %v10 = vstv %s4
  %11 = vst [vmem:[#allocation2] sm:$0x1] %v10
  $region1: #{tpu_custom_call.1} parent=0
    #allocation3 [shape = 'u8[1024]{0}', space=vmem, size = 0x400, scoped, tag = 'output window, operand 0, single buffered']
    #allocation4 [shape = 's32[1]{0}', space=sflag, size = 0x4, scoped, tag = 'scoped memory for tpu_custom_call.1']
    %12 = vsyncpa [#allocation4], 0
    // Predicated region
    $region2: #{tpu_custom_call.1} parent=1 // pred_check
      _
    $region3: #{tpu_custom_call.1} parent=1 // pred_check_branch
      %14 = sbr.rel (0) target = $region5
    $region4: #{tpu_custom_call.1} parent=1 // pred_region
      _
    $region5: #{tpu_custom_call.1} parent=1 // pred_fallthru
      _
    // Predicated region
    $region6: #{tpu_custom_call.1} parent=1 // pred_check
      _
    $region7: #{tpu_custom_call.1} parent=1 // pred_check_branch
      %16 = sbr.rel (0) target = $region9
    $region8: #{tpu_custom_call.1} parent=1 // pred_region
      _
    $region9: #{tpu_custom_call.1} parent=1 // pred_fallthru
      _
    // Predicated region
    $region10: #{tpu_custom_call.1} parent=1 // pred_check
      _
    $region11: #{tpu_custom_call.1} parent=1 // pred_check_branch
      %18 = sbr.rel (0) target = $region13
    $region12: #{tpu_custom_call.1} parent=1 // pred_region
      _
    $region13: #{tpu_custom_call.1} parent=1 // pred_fallthru
      _
    // Predicated region
    $region14: #{tpu_custom_call.1} parent=1 // pred_check
      _
    $region15: #{tpu_custom_call.1} parent=1 // pred_check_branch
      %20 = sbr.rel (0) target = $region17
    $region16: #{tpu_custom_call.1} parent=1 // pred_region
      _
    $region17: #{tpu_custom_call.1} parent=1 // pred_fallthru
      _
    // Predicated region
    $region18: #{tpu_custom_call.1} parent=1 // pred_check
      _
    $region19: #{tpu_custom_call.1} parent=1 // pred_check_branch
      %22 = sbr.rel (0) target = $region21
    $region20: #{tpu_custom_call.1} parent=1 // pred_region
      _
    $region21: #{tpu_custom_call.1} parent=1 // pred_fallthru
      _
    %v23 = vld [vmem:[%s0] sm:$0xf]
    %v24 = vld [vmem:[%s2] sm:$0xff]
    %v25 = vld [vmem:[%s2 + $0x8] sm:$0xff]
    %v26 = vld [vmem:[%s2 + $0x10] sm:$0xff]
    %v27 = vld [vmem:[%s2 + $0x18] sm:$0xff]
    %v28 = vld [vmem:[%s2 + $0x20] sm:$0xff]
    %v29 = vld [vmem:[%s2 + $0x28] sm:$0xff]
    %v30 = vld [vmem:[%s2 + $0x30] sm:$0xff]
    %v31 = vld [vmem:[%s2 + $0x38] sm:$0xff]
    %v32 = vld [vmem:[%s2 + $0x40] sm:$0xff]
    %v33 = vld [vmem:[%s2 + $0x48] sm:$0xff]
    %v34 = vld [vmem:[%s2 + $0x50] sm:$0xff]
    %v35 = vld [vmem:[%s2 + $0x58] sm:$0xff]
    %v36 = vld [vmem:[%s2 + $0x60] sm:$0xff]
    %v37 = vld [vmem:[%s2 + $0x68] sm:$0xff]
    %v38 = vld [vmem:[%s2 + $0x70] sm:$0xff]
    %v39 = vld [vmem:[%s2 + $0x78] sm:$0xff]
    %v40 = vld [vmem:[%s1] sm:$0xff]
    %v41 = vld [vmem:[%s1 + $0x8] sm:$0xff]
    %v42 = vld [vmem:[%s1 + $0x10] sm:$0xff]
    %v43 = vld [vmem:[%s1 + $0x18] sm:$0xff]
    %v44 = vld [vmem:[%s1 + $0x20] sm:$0xff]
    %v45 = vld [vmem:[%s1 + $0x28] sm:$0xff]
    %v46 = vld [vmem:[%s1 + $0x30] sm:$0xff]
    %v47 = vld [vmem:[%s1 + $0x38] sm:$0xff]
    %v48 = vld [vmem:[%s1 + $0x40] sm:$0xff]
    %v49 = vld [vmem:[%s1 + $0x48] sm:$0xff]
    %v50 = vld [vmem:[%s1 + $0x50] sm:$0xff]
    %v51 = vld [vmem:[%s1 + $0x58] sm:$0xff]
    %v52 = vld [vmem:[%s1 + $0x60] sm:$0xff]
    %v53 = vld [vmem:[%s1 + $0x68] sm:$0xff]
    %v54 = vld [vmem:[%s1 + $0x70] sm:$0xff]
    %v55 = vld [vmem:[%s1 + $0x78] sm:$0xff]
    %57 = vset.pattern.permute.xlu0 0
    %58 = vperm.xlu0 %57, %v40
    %v59 = vpop.permute.xlu0 %58
    %62 = vset.pattern.permute.xlu0 0
    %63 = vperm.xlu0 %62, %v41
    %v64 = vpop.permute.xlu0 %63
    %67 = vset.pattern.permute.xlu0 0
    %68 = vperm.xlu0 %67, %v42
    %v69 = vpop.permute.xlu0 %68
    %72 = vset.pattern.permute.xlu0 0
    %73 = vperm.xlu0 %72, %v43
    %v74 = vpop.permute.xlu0 %73
    %77 = vset.pattern.permute.xlu0 0
    %78 = vperm.xlu0 %77, %v44
    %v79 = vpop.permute.xlu0 %78
    %82 = vset.pattern.permute.xlu0 0
    %83 = vperm.xlu0 %82, %v45
    %v84 = vpop.permute.xlu0 %83
    %87 = vset.pattern.permute.xlu0 0
    %88 = vperm.xlu0 %87, %v46
    %v89 = vpop.permute.xlu0 %88
    %92 = vset.pattern.permute.xlu0 0
    %93 = vperm.xlu0 %92, %v47
    %v94 = vpop.permute.xlu0 %93
    %97 = vset.pattern.permute.xlu0 0
    %98 = vperm.xlu0 %97, %v48
    %v99 = vpop.permute.xlu0 %98
    %102 = vset.pattern.permute.xlu0 0
    %103 = vperm.xlu0 %102, %v49
    %v104 = vpop.permute.xlu0 %103
    %107 = vset.pattern.permute.xlu0 0
    %108 = vperm.xlu0 %107, %v50
    %v109 = vpop.permute.xlu0 %108
    %112 = vset.pattern.permute.xlu0 0
    %113 = vperm.xlu0 %112, %v51
    %v114 = vpop.permute.xlu0 %113
    %117 = vset.pattern.permute.xlu0 0
    %118 = vperm.xlu0 %117, %v52
    %v119 = vpop.permute.xlu0 %118
    %122 = vset.pattern.permute.xlu0 0
    %123 = vperm.xlu0 %122, %v53
    %v124 = vpop.permute.xlu0 %123
    %127 = vset.pattern.permute.xlu0 0
    %128 = vperm.xlu0 %127, %v54
    %v129 = vpop.permute.xlu0 %128
    %132 = vset.pattern.permute.xlu0 0
    %133 = vperm.xlu0 %132, %v55
    %v134 = vpop.permute.xlu0 %133
    %v136 = vlaneseq
    %v137 = vshrl.u32 %v136, 7
    %v138 = vsub.s32 0, %v137
    %v139 = vrot.slane %v23, %v138
    %v140 = vmul.f32 %v59, %v139
    %v141 = vmul.f32 %v64, %v139
    %v142 = vmul.f32 %v69, %v139
    %v143 = vmul.f32 %v74, %v139
    %v144 = vmul.f32 %v79, %v139
    %v145 = vmul.f32 %v84, %v139
    %v146 = vmul.f32 %v89, %v139
    %v147 = vmul.f32 %v94, %v139
    %v148 = vmul.f32 %v99, %v139
    %v149 = vmul.f32 %v104, %v139
    %v150 = vmul.f32 %v109, %v139
    %v151 = vmul.f32 %v114, %v139
    %v152 = vmul.f32 %v119, %v139
    %v153 = vmul.f32 %v124, %v139
    %v154 = vmul.f32 %v129, %v139
    %v155 = vmul.f32 %v134, %v139
    %157 = vset.pattern.permute.xlu0 0
    %158 = vperm.xlu0 %157, %v24
    %v159 = vpop.permute.xlu0 %158
    %162 = vset.pattern.permute.xlu0 0
    %163 = vperm.xlu0 %162, %v25
    %v164 = vpop.permute.xlu0 %163
    %167 = vset.pattern.permute.xlu0 0
    %168 = vperm.xlu0 %167, %v26
    %v169 = vpop.permute.xlu0 %168
    %172 = vset.pattern.permute.xlu0 0
    %173 = vperm.xlu0 %172, %v27
    %v174 = vpop.permute.xlu0 %173
    %177 = vset.pattern.permute.xlu0 0
    %178 = vperm.xlu0 %177, %v28
    %v179 = vpop.permute.xlu0 %178
    %182 = vset.pattern.permute.xlu0 0
    %183 = vperm.xlu0 %182, %v29
    %v184 = vpop.permute.xlu0 %183
    %187 = vset.pattern.permute.xlu0 0
    %188 = vperm.xlu0 %187, %v30
    %v189 = vpop.permute.xlu0 %188
    %192 = vset.pattern.permute.xlu0 0
    %193 = vperm.xlu0 %192, %v31
    %v194 = vpop.permute.xlu0 %193
    %197 = vset.pattern.permute.xlu0 0
    %198 = vperm.xlu0 %197, %v32
    %v199 = vpop.permute.xlu0 %198
    %202 = vset.pattern.permute.xlu0 0
    %203 = vperm.xlu0 %202, %v33
    %v204 = vpop.permute.xlu0 %203
    %207 = vset.pattern.permute.xlu0 0
    %208 = vperm.xlu0 %207, %v34
    %v209 = vpop.permute.xlu0 %208
    %212 = vset.pattern.permute.xlu0 0
    %213 = vperm.xlu0 %212, %v35
    %v214 = vpop.permute.xlu0 %213
    %217 = vset.pattern.permute.xlu0 0
    %218 = vperm.xlu0 %217, %v36
    %v219 = vpop.permute.xlu0 %218
    %222 = vset.pattern.permute.xlu0 0
    %223 = vperm.xlu0 %222, %v37
    %v224 = vpop.permute.xlu0 %223
    %227 = vset.pattern.permute.xlu0 0
    %228 = vperm.xlu0 %227, %v38
    %v229 = vpop.permute.xlu0 %228
    %232 = vset.pattern.permute.xlu0 0
    %233 = vperm.xlu0 %232, %v39
    %v234 = vpop.permute.xlu0 %233
    %v236 = vadd.f32 %v159, %v140
    %v237 = vadd.f32 %v164, %v141
    %v238 = vadd.f32 %v169, %v142
    %v239 = vadd.f32 %v174, %v143
    %v240 = vadd.f32 %v179, %v144
    %v241 = vadd.f32 %v184, %v145
    %v242 = vadd.f32 %v189, %v146
    %v243 = vadd.f32 %v194, %v147
    %v244 = vadd.f32 %v199, %v148
    %v245 = vadd.f32 %v204, %v149
    %v246 = vadd.f32 %v209, %v150
    %v247 = vadd.f32 %v214, %v151
    %v248 = vadd.f32 %v219, %v152
    %v249 = vadd.f32 %v224, %v153
    %v250 = vadd.f32 %v229, %v154
    %v251 = vadd.f32 %v234, %v155
    %252 = vset.pattern.permute.xlu0 1
    %253 = vperm.xlu0 %252, %v40
    %v254 = vpop.permute.xlu0 %253
    %256 = vset.pattern.permute.xlu0 1
    %257 = vperm.xlu0 %256, %v41
    %v258 = vpop.permute.xlu0 %257
    %260 = vset.pattern.permute.xlu0 1
    %261 = vperm.xlu0 %260, %v42
    %v262 = vpop.permute.xlu0 %261
    %264 = vset.pattern.permute.xlu0 1
    %265 = vperm.xlu0 %264, %v43
    %v266 = vpop.permute.xlu0 %265
    %268 = vset.pattern.permute.xlu0 1
    %269 = vperm.xlu0 %268, %v44
    %v270 = vpop.permute.xlu0 %269
    %272 = vset.pattern.permute.xlu0 1
    %273 = vperm.xlu0 %272, %v45
    %v274 = vpop.permute.xlu0 %273
    %276 = vset.pattern.permute.xlu0 1
    %277 = vperm.xlu0 %276, %v46
    %v278 = vpop.permute.xlu0 %277
    %280 = vset.pattern.permute.xlu0 1
    %281 = vperm.xlu0 %280, %v47
    %v282 = vpop.permute.xlu0 %281
    %284 = vset.pattern.permute.xlu0 1
    %285 = vperm.xlu0 %284, %v48
    %v286 = vpop.permute.xlu0 %285
    %288 = vset.pattern.permute.xlu0 1
    %289 = vperm.xlu0 %288, %v49
    %v290 = vpop.permute.xlu0 %289
    %292 = vset.pattern.permute.xlu0 1
    %293 = vperm.xlu0 %292, %v50
    %v294 = vpop.permute.xlu0 %293
    %296 = vset.pattern.permute.xlu0 1
    %297 = vperm.xlu0 %296, %v51
    %v298 = vpop.permute.xlu0 %297
    %300 = vset.pattern.permute.xlu0 1
    %301 = vperm.xlu0 %300, %v52
    %v302 = vpop.permute.xlu0 %301
    %304 = vset.pattern.permute.xlu0 1
    %305 = vperm.xlu0 %304, %v53
    %v306 = vpop.permute.xlu0 %305
    %308 = vset.pattern.permute.xlu0 1
    %309 = vperm.xlu0 %308, %v54
    %v310 = vpop.permute.xlu0 %309
    %312 = vset.pattern.permute.xlu0 1
    %313 = vperm.xlu0 %312, %v55
    %v314 = vpop.permute.xlu0 %313
    %v316 = vlaneseq
    %v317 = vshrl.u32 %v316, 7
    %v318 = vsub.s32 1, %v317
    %v319 = vrot.slane %v23, %v318
    %v320 = vmul.f32 %v254, %v319
    %v321 = vmul.f32 %v258, %v319
    %v322 = vmul.f32 %v262, %v319
    %v323 = vmul.f32 %v266, %v319
    %v324 = vmul.f32 %v270, %v319
    %v325 = vmul.f32 %v274, %v319
    %v326 = vmul.f32 %v278, %v319
    %v327 = vmul.f32 %v282, %v319
    %v328 = vmul.f32 %v286, %v319
    %v329 = vmul.f32 %v290, %v319
    %v330 = vmul.f32 %v294, %v319
    %v331 = vmul.f32 %v298, %v319
    %v332 = vmul.f32 %v302, %v319
    %v333 = vmul.f32 %v306, %v319
    %v334 = vmul.f32 %v310, %v319
    %v335 = vmul.f32 %v314, %v319
    %v336 = vadd.f32 %v236, %v320
    %v337 = vadd.f32 %v237, %v321
    %v338 = vadd.f32 %v238, %v322
    %v339 = vadd.f32 %v239, %v323
    %v340 = vadd.f32 %v240, %v324
    %v341 = vadd.f32 %v241, %v325
    %v342 = vadd.f32 %v242, %v326
    %v343 = vadd.f32 %v243, %v327
    %v344 = vadd.f32 %v244, %v328
    %v345 = vadd.f32 %v245, %v329
    %v346 = vadd.f32 %v246, %v330
    %v347 = vadd.f32 %v247, %v331
    %v348 = vadd.f32 %v248, %v332
    %v349 = vadd.f32 %v249, %v333
    %v350 = vadd.f32 %v250, %v334
    %v351 = vadd.f32 %v251, %v335
    %352 = vset.pattern.permute.xlu0 2
    %353 = vperm.xlu0 %352, %v40
    %v354 = vpop.permute.xlu0 %353
    %356 = vset.pattern.permute.xlu0 2
    %357 = vperm.xlu0 %356, %v41
    %v358 = vpop.permute.xlu0 %357
    %360 = vset.pattern.permute.xlu0 2
    %361 = vperm.xlu0 %360, %v42
    %v362 = vpop.permute.xlu0 %361
    %364 = vset.pattern.permute.xlu0 2
    %365 = vperm.xlu0 %364, %v43
    %v366 = vpop.permute.xlu0 %365
    %368 = vset.pattern.permute.xlu0 2
    %369 = vperm.xlu0 %368, %v44
    %v370 = vpop.permute.xlu0 %369
    %372 = vset.pattern.permute.xlu0 2
    %373 = vperm.xlu0 %372, %v45
    %v374 = vpop.permute.xlu0 %373
    %376 = vset.pattern.permute.xlu0 2
    %377 = vperm.xlu0 %376, %v46
    %v378 = vpop.permute.xlu0 %377
    %380 = vset.pattern.permute.xlu0 2
    %381 = vperm.xlu0 %380, %v47
    %v382 = vpop.permute.xlu0 %381
    %384 = vset.pattern.permute.xlu0 2
    %385 = vperm.xlu0 %384, %v48
    %v386 = vpop.permute.xlu0 %385
    %388 = vset.pattern.permute.xlu0 2
    %389 = vperm.xlu0 %388, %v49
    %v390 = vpop.permute.xlu0 %389
    %392 = vset.pattern.permute.xlu0 2
    %393 = vperm.xlu0 %392, %v50
    %v394 = vpop.permute.xlu0 %393
    %396 = vset.pattern.permute.xlu0 2
    %397 = vperm.xlu0 %396, %v51
    %v398 = vpop.permute.xlu0 %397
    %400 = vset.pattern.permute.xlu0 2
    %401 = vperm.xlu0 %400, %v52
    %v402 = vpop.permute.xlu0 %401
    %404 = vset.pattern.permute.xlu0 2
    %405 = vperm.xlu0 %404, %v53
    %v406 = vpop.permute.xlu0 %405
    %408 = vset.pattern.permute.xlu0 2
    %409 = vperm.xlu0 %408, %v54
    %v410 = vpop.permute.xlu0 %409
    %412 = vset.pattern.permute.xlu0 2
    %413 = vperm.xlu0 %412, %v55
    %v414 = vpop.permute.xlu0 %413
    %v416 = vlaneseq
    %v417 = vshrl.u32 %v416, 7
    %v418 = vsub.s32 2, %v417
    %v419 = vrot.slane %v23, %v418
    %v420 = vmul.f32 %v354, %v419
    %v421 = vmul.f32 %v358, %v419
    %v422 = vmul.f32 %v362, %v419
    %v423 = vmul.f32 %v366, %v419
    %v424 = vmul.f32 %v370, %v419
    %v425 = vmul.f32 %v374, %v419
    %v426 = vmul.f32 %v378, %v419
    %v427 = vmul.f32 %v382, %v419
    %v428 = vmul.f32 %v386, %v419
    %v429 = vmul.f32 %v390, %v419
    %v430 = vmul.f32 %v394, %v419
    %v431 = vmul.f32 %v398, %v419
    %v432 = vmul.f32 %v402, %v419
    %v433 = vmul.f32 %v406, %v419
    %v434 = vmul.f32 %v410, %v419
    %v435 = vmul.f32 %v414, %v419
    %v436 = vadd.f32 %v336, %v420
    %v437 = vadd.f32 %v337, %v421
    %v438 = vadd.f32 %v338, %v422
    %v439 = vadd.f32 %v339, %v423
    %v440 = vadd.f32 %v340, %v424
    %v441 = vadd.f32 %v341, %v425
    %v442 = vadd.f32 %v342, %v426
    %v443 = vadd.f32 %v343, %v427
    %v444 = vadd.f32 %v344, %v428
    %v445 = vadd.f32 %v345, %v429
    %v446 = vadd.f32 %v346, %v430
    %v447 = vadd.f32 %v347, %v431
    %v448 = vadd.f32 %v348, %v432
    %v449 = vadd.f32 %v349, %v433
    %v450 = vadd.f32 %v350, %v434
    %v451 = vadd.f32 %v351, %v435
    %452 = vset.pattern.permute.xlu0 3
    %453 = vperm.xlu0 %452, %v40
    %v454 = vpop.permute.xlu0 %453
    %456 = vset.pattern.permute.xlu0 3
    %457 = vperm.xlu0 %456, %v41
    %v458 = vpop.permute.xlu0 %457
    %460 = vset.pattern.permute.xlu0 3
    %461 = vperm.xlu0 %460, %v42
    %v462 = vpop.permute.xlu0 %461
    %464 = vset.pattern.permute.xlu0 3
    %465 = vperm.xlu0 %464, %v43
    %v466 = vpop.permute.xlu0 %465
    %468 = vset.pattern.permute.xlu0 3
    %469 = vperm.xlu0 %468, %v44
    %v470 = vpop.permute.xlu0 %469
    %472 = vset.pattern.permute.xlu0 3
    %473 = vperm.xlu0 %472, %v45
    %v474 = vpop.permute.xlu0 %473
    %476 = vset.pattern.permute.xlu0 3
    %477 = vperm.xlu0 %476, %v46
    %v478 = vpop.permute.xlu0 %477
    %480 = vset.pattern.permute.xlu0 3
    %481 = vperm.xlu0 %480, %v47
    %v482 = vpop.permute.xlu0 %481
    %484 = vset.pattern.permute.xlu0 3
    %485 = vperm.xlu0 %484, %v48
    %v486 = vpop.permute.xlu0 %485
    %488 = vset.pattern.permute.xlu0 3
    %489 = vperm.xlu0 %488, %v49
    %v490 = vpop.permute.xlu0 %489
    %492 = vset.pattern.permute.xlu0 3
    %493 = vperm.xlu0 %492, %v50
    %v494 = vpop.permute.xlu0 %493
    %496 = vset.pattern.permute.xlu0 3
    %497 = vperm.xlu0 %496, %v51
    %v498 = vpop.permute.xlu0 %497
    %500 = vset.pattern.permute.xlu0 3
    %501 = vperm.xlu0 %500, %v52
    %v502 = vpop.permute.xlu0 %501
    %504 = vset.pattern.permute.xlu0 3
    %505 = vperm.xlu0 %504, %v53
    %v506 = vpop.permute.xlu0 %505
    %508 = vset.pattern.permute.xlu0 3
    %509 = vperm.xlu0 %508, %v54
    %v510 = vpop.permute.xlu0 %509
    %512 = vset.pattern.permute.xlu0 3
    %513 = vperm.xlu0 %512, %v55
    %v514 = vpop.permute.xlu0 %513
    %v516 = vlaneseq
    %v517 = vshrl.u32 %v516, 7
    %v518 = vsub.s32 3, %v517
    %v519 = vrot.slane %v23, %v518
    %v520 = vmul.f32 %v454, %v519
    %v521 = vmul.f32 %v458, %v519
    %v522 = vmul.f32 %v462, %v519
    %v523 = vmul.f32 %v466, %v519
    %v524 = vmul.f32 %v470, %v519
    %v525 = vmul.f32 %v474, %v519
    %v526 = vmul.f32 %v478, %v519
    %v527 = vmul.f32 %v482, %v519
    %v528 = vmul.f32 %v486, %v519
    %v529 = vmul.f32 %v490, %v519
    %v530 = vmul.f32 %v494, %v519
    %v531 = vmul.f32 %v498, %v519
    %v532 = vmul.f32 %v502, %v519
    %v533 = vmul.f32 %v506, %v519
    %v534 = vmul.f32 %v510, %v519
    %v535 = vmul.f32 %v514, %v519
    %v536 = vadd.f32 %v436, %v520
    %v537 = vadd.f32 %v437, %v521
    %v538 = vadd.f32 %v438, %v522
    %v539 = vadd.f32 %v439, %v523
    %v540 = vadd.f32 %v440, %v524
    %v541 = vadd.f32 %v441, %v525
    %v542 = vadd.f32 %v442, %v526
    %v543 = vadd.f32 %v443, %v527
    %v544 = vadd.f32 %v444, %v528
    %v545 = vadd.f32 %v445, %v529
    %v546 = vadd.f32 %v446, %v530
    %v547 = vadd.f32 %v447, %v531
    %v548 = vadd.f32 %v448, %v532
    %v549 = vadd.f32 %v449, %v533
    %v550 = vadd.f32 %v450, %v534
    %v551 = vadd.f32 %v451, %v535
    %v552 = vmax.f32 %v536, 0.0
    %v553 = vmax.f32 %v537, 0.0
    %v554 = vmax.f32 %v538, 0.0
    %v555 = vmax.f32 %v539, 0.0
    %v556 = vmax.f32 %v540, 0.0
    %v557 = vmax.f32 %v541, 0.0
    %v558 = vmax.f32 %v542, 0.0
    %v559 = vmax.f32 %v543, 0.0
    %v560 = vmax.f32 %v544, 0.0
    %v561 = vmax.f32 %v545, 0.0
    %v562 = vmax.f32 %v546, 0.0
    %v563 = vmax.f32 %v547, 0.0
    %v564 = vmax.f32 %v548, 0.0
    %v565 = vmax.f32 %v549, 0.0
    %v566 = vmax.f32 %v550, 0.0
    %v567 = vmax.f32 %v551, 0.0
    %v568 = vld [vmem:[%s3] sm:$0xff]
    %v569 = vld [vmem:[%s3 + $0x8] sm:$0xff]
    %v570 = vld [vmem:[%s3 + $0x10] sm:$0xff]
    %v571 = vld [vmem:[%s3 + $0x18] sm:$0xff]
    %v572 = vld [vmem:[%s3 + $0x20] sm:$0xff]
    %v573 = vld [vmem:[%s3 + $0x28] sm:$0xff]
    %v574 = vld [vmem:[%s3 + $0x30] sm:$0xff]
    %v575 = vld [vmem:[%s3 + $0x38] sm:$0xff]
    %v576 = vld [vmem:[%s3 + $0x40] sm:$0xff]
    %v577 = vld [vmem:[%s3 + $0x48] sm:$0xff]
    %v578 = vld [vmem:[%s3 + $0x50] sm:$0xff]
    %v579 = vld [vmem:[%s3 + $0x58] sm:$0xff]
    %v580 = vld [vmem:[%s3 + $0x60] sm:$0xff]
    %v581 = vld [vmem:[%s3 + $0x68] sm:$0xff]
    %v582 = vld [vmem:[%s3 + $0x70] sm:$0xff]
    %v583 = vld [vmem:[%s3 + $0x78] sm:$0xff]
    %585 = vset.pattern.permute.xlu0 0
    %586 = vperm.xlu0 %585, %v568
    %v587 = vpop.permute.xlu0 %586
    %590 = vset.pattern.permute.xlu0 0
    %591 = vperm.xlu0 %590, %v569
    %v592 = vpop.permute.xlu0 %591
    %595 = vset.pattern.permute.xlu0 0
    %596 = vperm.xlu0 %595, %v570
    %v597 = vpop.permute.xlu0 %596
    %600 = vset.pattern.permute.xlu0 0
    %601 = vperm.xlu0 %600, %v571
    %v602 = vpop.permute.xlu0 %601
    %605 = vset.pattern.permute.xlu0 0
    %606 = vperm.xlu0 %605, %v572
    %v607 = vpop.permute.xlu0 %606
    %610 = vset.pattern.permute.xlu0 0
    %611 = vperm.xlu0 %610, %v573
    %v612 = vpop.permute.xlu0 %611
    %615 = vset.pattern.permute.xlu0 0
    %616 = vperm.xlu0 %615, %v574
    %v617 = vpop.permute.xlu0 %616
    %620 = vset.pattern.permute.xlu0 0
    %621 = vperm.xlu0 %620, %v575
    %v622 = vpop.permute.xlu0 %621
    %625 = vset.pattern.permute.xlu0 0
    %626 = vperm.xlu0 %625, %v576
    %v627 = vpop.permute.xlu0 %626
    %630 = vset.pattern.permute.xlu0 0
    %631 = vperm.xlu0 %630, %v577
    %v632 = vpop.permute.xlu0 %631
    %635 = vset.pattern.permute.xlu0 0
    %636 = vperm.xlu0 %635, %v578
    %v637 = vpop.permute.xlu0 %636
    %640 = vset.pattern.permute.xlu0 0
    %641 = vperm.xlu0 %640, %v579
    %v642 = vpop.permute.xlu0 %641
    %645 = vset.pattern.permute.xlu0 0
    %646 = vperm.xlu0 %645, %v580
    %v647 = vpop.permute.xlu0 %646
    %650 = vset.pattern.permute.xlu0 0
    %651 = vperm.xlu0 %650, %v581
    %v652 = vpop.permute.xlu0 %651
    %655 = vset.pattern.permute.xlu0 0
    %656 = vperm.xlu0 %655, %v582
    %v657 = vpop.permute.xlu0 %656
    %660 = vset.pattern.permute.xlu0 0
    %661 = vperm.xlu0 %660, %v583
    %v662 = vpop.permute.xlu0 %661
    %v664 = vmul.f32 %v552, %v587
    %v665 = vmul.f32 %v553, %v592
    %v666 = vmul.f32 %v554, %v597
    %v667 = vmul.f32 %v555, %v602
    %v668 = vmul.f32 %v556, %v607
    %v669 = vmul.f32 %v557, %v612
    %v670 = vmul.f32 %v558, %v617
    %v671 = vmul.f32 %v559, %v622
    %v672 = vmul.f32 %v560, %v627
    %v673 = vmul.f32 %v561, %v632
    %v674 = vmul.f32 %v562, %v637
    %v675 = vmul.f32 %v563, %v642
    %v676 = vmul.f32 %v564, %v647
    %v677 = vmul.f32 %v565, %v652
    %v678 = vmul.f32 %v566, %v657
    %v679 = vmul.f32 %v567, %v662
    %v680 = vadd.f32 %v664, %v665
    %v681 = vadd.f32 %v680, %v666
    %v682 = vadd.f32 %v681, %v667
    %v683 = vadd.f32 %v682, %v668
    %v684 = vadd.f32 %v683, %v669
    %v685 = vadd.f32 %v684, %v670
    %v686 = vadd.f32 %v685, %v671
    %v687 = vadd.f32 %v686, %v672
    %v688 = vadd.f32 %v687, %v673
    %v689 = vadd.f32 %v688, %v674
    %v690 = vadd.f32 %v689, %v675
    %v691 = vadd.f32 %v690, %v676
    %v692 = vadd.f32 %v691, %v677
    %v693 = vadd.f32 %v692, %v678
    %v694 = vadd.f32 %v693, %v679
    %v695 = vrot.slane %v694, 4
    %v696 = vadd.f32 %v694, %v695
    %v697 = vrot.slane %v696, 2
    %v698 = vadd.f32 %v696, %v697
    %v699 = vrot.slane %v698, 1
    %v700 = vadd.f32 %v698, %v699
    %v701 = vld [vmem:[#allocation2] sm:$0x1]
    %703 = vset.pattern.permute.xlu0 0
    %704 = vperm.xlu0 %703, %v701
    %v705 = vpop.permute.xlu0 %704
    %v707 = vlaneseq
    %v708 = vshrl.u32 %v707, 7
    %v709 = vsub.s32 0, %v708
    %v710 = vrot.slane %v705, %v709
    %v711 = vadd.f32 %v700, %v710
    %v712 = vsub.f32 0.0, %v711
    %v713 = vmul.f32 %v712, 1.442695
    %v714 = vpow.pop %v713
    %v715 = vadd.f32 %v714, 1.0
    %v716 = vrcp.pop %v715
    %v717 = vmul.f32 1.0, %v716
    %v718 = vsub.f32 1.0, %v717
    %719 = vst [vmem:[#allocation3] sm:$0x1] %v718
    %720 = vst [vmem:[#allocation3 + $0x1] sm:$0x1] %v717
    // Predicated region
    $region22: #{tpu_custom_call.1} parent=1 // pred_check
      _
    $region23: #{tpu_custom_call.1} parent=1 // pred_check_branch
      %722 = sbr.rel (0) target = $region25
    $region24: #{tpu_custom_call.1} parent=1 // pred_region
      %s724 = ssub.s32 32, 32
      %725 = vsyncadd [#allocation4], %s724
      %s727 = sshll.u32 [#allocation3], 4
      %s728 = int_to_ptr.vmem [resolvable:$true] %s727
      %730 = dma.vmem_to_hbm [thread:$0]  %s728, 32, %s5, [#allocation4]
    $region25: #{tpu_custom_call.1} parent=1 // pred_fallthru
      _
    // Predicated region
    $region26: #{tpu_custom_call.1} parent=1 // pred_check
      _
    $region27: #{tpu_custom_call.1} parent=1 // pred_check_branch
      %732 = sbr.rel (0) target = $region29
    $region28: #{tpu_custom_call.1} parent=1 // pred_region
      %733 = dma.done [#allocation4], 32
    $region29: #{tpu_custom_call.1} parent=1 // pred_fallthru
      _
    %734 = vsyncpa [#allocation4], 1

</llo_original>
